<compile_context>
chip_gen: v5e
topology: v5e:2x2
jax: 0.10.0
libtpu: 0.0.40
codegen_flags: <defaults>
</compile_context>

<pallas_src>
import jax
import jax.numpy as jnp
from jax.experimental import pallas as pl
from jax.experimental.pallas import tpu as pltpu


def _round_up(x: int, m: int) -> int:
    return ((x + m - 1) // m) * m


def _vmem_capacity_bytes() -> int:
    """Per-core VMEM capacity; conservative fallback if the query fails."""
    try:
        return int(pltpu.get_tpu_info().vmem_capacity_bytes)
    except Exception:
        return 64 * 1024 * 1024  # v7x per-TensorCore size (most restrictive)


def _spec(shape, index_map, single_buffer):
    """BlockSpec helper; request single buffering for constant-index blocks."""
    if single_buffer:
        try:
            return pl.BlockSpec(shape, index_map, pipeline_mode=pl.Buffered(1))
        except TypeError:  # older BlockSpec signature: fall back silently
            pass
    return pl.BlockSpec(shape, index_map)


def _mlp_kernel(x_ref, w1t_ref, b1_ref, w2t_ref, b2_ref, o_ref, acc_ref):
    """Fused fc1 -> ReLU -> fc2 on one (TB, K_pad) batch tile.

    Grid = (batch tiles, hidden chunks).  The hidden axis is a reduction
    ("arbitrary", last): each step does fc1 + ReLU for one H chunk and
    accumulates its fc2 partial product into an f32 VMEM scratch; the output
    tile (bias added) is stored only on the last chunk.  When the whole hidden
    dim fits VMEM the hidden grid axis has length 1 and this degenerates to
    the fully fused single-pass kernel.
    """
    j = pl.program_id(1)

    @pl.when(j == 0)
    def _():
        acc_ref[...] = jnp.zeros_like(acc_ref)

    # fc1 chunk: (TB, K) @ (K, TH), f32 accumulation on the MXU.
    x = x_ref[...].astype(w1t_ref.dtype)
    h = jnp.dot(x, w1t_ref[...], preferred_element_type=jnp.float32)
    # Bias + ReLU epilogue stays f32 (VPU path; fine on every generation).
    h = jnp.maximum(h + b1_ref[...], 0.0)
    # fc2 partial: (TB, TH) @ (TH, N), accumulated in f32.
    acc_ref[...] += jnp.dot(h.astype(w2t_ref.dtype), w2t_ref[...],
                            preferred_element_type=jnp.float32)

    @pl.when(j == pl.num_programs(1) - 1)
    def _():
        o_ref[...] = (acc_ref[...] + b2_ref[...]).astype(o_ref.dtype)


def make_simple_nn_forward(w1, b1, w2, b2, *, compute_dtype=jnp.float32,
                           max_batch_tile=512, feature_align=128):
    """Build a jitted forward pass for SimpleNN.

    Weights use the PyTorch nn.Linear convention:
      w1: (hidden, input), b1: (hidden,), w2: (output, hidden), b2: (output,)

    Transposition to (in, out) layout and zero-padding to `feature_align`
    multiples happen once here, outside the per-call path.  Zero padding is
    numerically exact for dot + bias + ReLU (padded hidden columns are
    relu(0 + 0) = 0 and hit zero rows of the padded fc2 weight; padded output
    columns are sliced off).

    compute_dtype=bfloat16 is recommended on ALL TPU generations (v5e's MXU is
    natively bf16; f32 matmul lowers to multi-pass).  Accumulation and the
    bias+ReLU epilogue stay f32 either way.  feature_align=256 fills the
    v6e/v7x 2x256x256 MXU per pass when the extra padding is cheap.
    """
    H, K = w1.shape
    N, H2 = w2.shape
    assert H2 == H, "fc2 in_features must equal fc1 out_features"

    align = max(128, int(feature_align))
    K_pad = _round_up(K, align)
    H_pad = _round_up(H, align)
    N_pad = _round_up(N, align)

    w1t = jnp.pad(w1.T.astype(compute_dtype), ((0, K_pad - K), (0, H_pad - H)))
    w2t = jnp.pad(w2.T.astype(compute_dtype), ((0, H_pad - H), (0, N_pad - N)))
    b1r = jnp.pad(b1.astype(jnp.float32), (0, H_pad - H)).reshape(1, H_pad)
    b2r = jnp.pad(b2.astype(jnp.float32), (0, N_pad - N)).reshape(1, N_pad)

    w_item = jnp.dtype(compute_dtype).itemsize
    # bf16 vregs pack 16 sublanes x 128 lanes; f32 packs 8.
    sublane_mult = 16 if jnp.dtype(compute_dtype) == jnp.dtype(jnp.bfloat16) else 8

    # Generation-aware usable-VMEM budget (leave headroom for compiler scratch).
    vmem_budget = int(_vmem_capacity_bytes() * 0.85)

    @jax.jit
    def forward(x):
        B = x.shape[0]
        out_dtype = x.dtype
        x_item = jnp.dtype(x.dtype).itemsize
        out_item = jnp.dtype(out_dtype).itemsize

        def vmem_need(tb, th):
            wbuf = 1 if th == H_pad else 2   # constant-index weights: Buffered(1)
            return (2 * tb * K_pad * x_item          # streamed x tile
                    + 2 * tb * N_pad * out_item      # streamed out tile
                    + wbuf * K_pad * th * w_item     # w1t chunk(s)
                    + wbuf * th * N_pad * w_item     # w2t chunk(s)
                    + wbuf * th * 4                  # b1 chunk(s)
                    + N_pad * 4                      # b2 (constant, single buf)
                    + tb * N_pad * 4                 # f32 accumulator scratch
                    + tb * th * 4)                   # f32 hidden activation

        # ---- batch tile: VMEM budget (not a constant) should bound TB.
        B_r = _round_up(B, sublane_mult)
        TB = min(max_batch_tile, B_r)
        # v7x: prefer >=2 batch grid steps so the second TensorCore has work.
        if B_r <= max_batch_tile and B_r >= 2 * sublane_mult:
            TB = _round_up((B_r + 1) // 2, sublane_mult)

        # ---- hidden chunk: largest 128-multiple divisor of H_pad that fits.
        n_units = H_pad // 128
        th_candidates = sorted({128 * d for d in range(1, n_units + 1)
                                if n_units % d == 0}, reverse=True)
        TH = th_candidates[-1]
        for th in th_candidates:
            if vmem_need(TB, th) <= vmem_budget:
                TH = th
                break
        # Last resort: shrink the batch tile if even TH=128 is over budget.
        while vmem_need(TB, TH) > vmem_budget and TB > sublane_mult:
            TB = max(sublane_mult, _round_up(TB // 2, sublane_mult))

        B_pad = _round_up(B_r, TB)
        grid = (B_pad // TB, H_pad // TH)
        full_h = (TH == H_pad)

        xp = jnp.pad(x, ((0, B_pad - B), (0, K_pad - K)))

        need = vmem_need(TB, TH)
        compiler_kwargs = dict(dimension_semantics=("parallel", "arbitrary"))
        # Only override the scoped limit when the most conservative default
        # (16 MiB, v5e) could be too small; cap by the generation-aware budget.
        if need > 16 * 1024 * 1024:
            compiler_kwargs["vmem_limit_bytes"] = min(int(need * 1.5), vmem_budget)

        cost = pl.CostEstimate(
            flops=2 * B_pad * (K_pad * H_pad + H_pad * N_pad),
            transcendentals=0,
            bytes_accessed=(xp.size * x_item
                            + (w1t.size + w2t.size) * w_item
                            + (b1r.size + b2r.size) * 4
                            + B_pad * N_pad * out_item),
        )

        out_padded = pl.pallas_call(
            _mlp_kernel,
            out_shape=jax.ShapeDtypeStruct((B_pad, N_pad), out_dtype),
            grid=grid,
            in_specs=[
                pl.BlockSpec((TB, K_pad), lambda i, j: (i, 0)),              # x
                _spec((K_pad, TH), lambda i, j: (0, j), full_h),             # w1t
                _spec((1, TH), lambda i, j: (0, j), full_h),                 # b1
                _spec((TH, N_pad), lambda i, j: (j, 0), full_h),             # w2t
                _spec((1, N_pad), lambda i, j: (0, 0), True),                # b2
            ],
            out_specs=pl.BlockSpec((TB, N_pad), lambda i, j: (i, 0)),
            scratch_shapes=[pltpu.VMEM((TB, N_pad), jnp.float32)],
            compiler_params=pltpu.CompilerParams(**compiler_kwargs),
            cost_estimate=cost,
        )(xp, w1t, b1r, w2t, b2r)

        return out_padded[:B, :N]

    return forward


def _reference(x, w1, b1, w2, b2):
    h = jnp.maximum(x @ w1.T + b1, 0.0)
    return h @ w2.T + b2


if __name__ == "__main__":
    # Small shapes consistent with SimpleNN(input_size, hidden_size, output_size)
    batch, input_size, hidden_size, output_size = 8, 16, 32, 8

    key = jax.random.PRNGKey(0)
    kx, kw1, kb1, kw2, kb2 = jax.random.split(key, 5)

    x = jax.random.normal(kx, (batch, input_size), dtype=jnp.float32)
    # PyTorch Linear shapes: weight (out, in), bias (out,)
    w1 = jax.random.normal(kw1, (hidden_size, input_size), dtype=jnp.float32) * 0.1
    b1 = jax.random.normal(kb1, (hidden_size,), dtype=jnp.float32) * 0.1
    w2 = jax.random.normal(kw2, (output_size, hidden_size), dtype=jnp.float32) * 0.1
    b2 = jax.random.normal(kb2, (output_size,), dtype=jnp.float32) * 0.1

    ref = _reference(x, w1, b1, w2, b2)

    # f32 path (exact vs reference).
    forward_f32 = make_simple_nn_forward(w1, b1, w2, b2)
    out = jax.block_until_ready(forward_f32(x))
    assert out.shape == (batch, output_size)
    assert jnp.allclose(out, ref, atol=1e-4, rtol=1e-4), "f32 mismatch vs reference"

    # bf16 matmul operands, f32 accumulation (recommended on v5e/v6e/v7x alike).
    forward_bf16 = make_simple_nn_forward(w1, b1, w2, b2,
                                          compute_dtype=jnp.bfloat16)
    out_bf16 = jax.block_until_ready(forward_bf16(x))
    assert out_bf16.shape == (batch, output_size)
    assert jnp.allclose(out_bf16, ref, atol=1e-1, rtol=1e-1), "bf16 far from reference"

    print("KERNEL_OK")
</pallas_src>

<mosaic_0001>
module attributes {stable_mosaic.version = 11 : i64} {
  func.func @_mlp_kernel(%arg0: i32, %arg1: i32, %arg2: memref<8x128xf32, #tpu.memory_space<vmem>>, %arg3: memref<128x128xf32, #tpu.memory_space<vmem>>, %arg4: memref<1x128xf32, #tpu.memory_space<vmem>>, %arg5: memref<128x128xf32, #tpu.memory_space<vmem>>, %arg6: memref<1x128xf32, #tpu.memory_space<vmem>>, %arg7: memref<8x128xf32, #tpu.memory_space<vmem>>, %arg8: memref<8x128xf32, #tpu.memory_space<vmem>>) attributes {dimension_semantics = [#tpu.dimension_semantics<parallel>, #tpu.dimension_semantics<arbitrary>], iteration_bounds = array<i64: 1, 1>, scalar_prefetch = 0 : i64, scratch_operands = 1 : i64, tpu.core_type = #tpu.core_type<tc>, window_params = [{transform_indices = @transform_0, window_bounds = array<i64: 8, 128>}, {pipeline_mode = #tpu.pipeline_mode<synchronous>, transform_indices = @transform_1, window_bounds = array<i64: 128, 128>}, {pipeline_mode = #tpu.pipeline_mode<synchronous>, transform_indices = @transform_2, window_bounds = array<i64: 1, 128>}, {pipeline_mode = #tpu.pipeline_mode<synchronous>, transform_indices = @transform_3, window_bounds = array<i64: 128, 128>}, {pipeline_mode = #tpu.pipeline_mode<synchronous>, transform_indices = @transform_4, window_bounds = array<i64: 1, 128>}, {transform_indices = @transform_5, window_bounds = array<i64: 8, 128>}]} {
    %c0_i32 = arith.constant 0 : i32
    %0 = arith.cmpi eq, %arg1, %c0_i32 : i32
    %1 = arith.extui %0 : i1 to i32
    %c0_i32_0 = arith.constant 0 : i32
    %2 = arith.cmpi ne, %1, %c0_i32_0 : i32
    scf.if %2 {
      %cst_16 = arith.constant 0.000000e+00 : f32
      %19 = vector.broadcast %cst_16 : f32 to vector<8x128xf32>
      %c0_17 = arith.constant 0 : index
      %c0_18 = arith.constant 0 : index
      %20 = vector.load %arg8[%c0_17, %c0_18] : memref<8x128xf32, #tpu.memory_space<vmem>>, vector<8x128xf32>
      tpu.vector_store %arg8[%c0_17, %c0_18], %19 {strides = array<i32>} : memref<8x128xf32, #tpu.memory_space<vmem>>, vector<8x128xf32>,
    } else {
    }
    %c0 = arith.constant 0 : index
    %c0_1 = arith.constant 0 : index
    %3 = vector.load %arg2[%c0, %c0_1] : memref<8x128xf32, #tpu.memory_space<vmem>>, vector<8x128xf32>
    %c0_2 = arith.constant 0 : index
    %c0_3 = arith.constant 0 : index
    %4 = vector.load %arg3[%c0_2, %c0_3] : memref<128x128xf32, #tpu.memory_space<vmem>>, vector<128x128xf32>
    %cst = arith.constant dense<0.000000e+00> : vector<8x128xf32>
    %5 = tpu.matmul %3, %4, %cst {dimension_numbers = #tpu.dot_dimension_numbers<[1], [0], [0], [1], [0, 0, 1, 1], [], []>} : vector<8x128xf32>, vector<128x128xf32>, vector<8x128xf32> -> vector<8x128xf32>
    %c0_4 = arith.constant 0 : index
    %c0_5 = arith.constant 0 : index
    %6 = vector.load %arg4[%c0_4, %c0_5] : memref<1x128xf32, #tpu.memory_space<vmem>>, vector<1x128xf32>
    %7 = vector.broadcast %6 : vector<1x128xf32> to vector<8x128xf32>
    %8 = arith.addf %5, %7 : vector<8x128xf32>
    %cst_6 = arith.constant 0.000000e+00 : f32
    %9 = vector.broadcast %cst_6 : f32 to vector<8x128xf32>
    %10 = arith.maximumf %8, %9 : vector<8x128xf32>
    %c0_7 = arith.constant 0 : index
    %c0_8 = arith.constant 0 : index
    %11 = vector.load %arg8[%c0_7, %c0_8] : memref<8x128xf32, #tpu.memory_space<vmem>>, vector<8x128xf32>
    %c0_9 = arith.constant 0 : index
    %c0_10 = arith.constant 0 : index
    %12 = vector.load %arg5[%c0_9, %c0_10] : memref<128x128xf32, #tpu.memory_space<vmem>>, vector<128x128xf32>
    %cst_11 = arith.constant dense<0.000000e+00> : vector<8x128xf32>
    %13 = tpu.matmul %10, %12, %cst_11 {dimension_numbers = #tpu.dot_dimension_numbers<[1], [0], [0], [1], [0, 0, 1, 1], [], []>} : vector<8x128xf32>, vector<128x128xf32>, vector<8x128xf32> -> vector<8x128xf32>
    %14 = arith.addf %11, %13 : vector<8x128xf32>
    %c0_12 = arith.constant 0 : index
    %c0_13 = arith.constant 0 : index
    %15 = vector.load %arg8[%c0_12, %c0_13] : memref<8x128xf32, #tpu.memory_space<vmem>>, vector<8x128xf32>
    tpu.vector_store %arg8[%c0_12, %c0_13], %14 {strides = array<i32>} : memref<8x128xf32, #tpu.memory_space<vmem>>, vector<8x128xf32>,
    %c0_i32_14 = arith.constant 0 : i32
    %16 = arith.cmpi eq, %arg1, %c0_i32_14 : i32
    %17 = arith.extui %16 : i1 to i32
    %c0_i32_15 = arith.constant 0 : i32
    %18 = arith.cmpi ne, %17, %c0_i32_15 : i32
    scf.if %18 {
      %c0_16 = arith.constant 0 : index
      %c0_17 = arith.constant 0 : index
      %19 = vector.load %arg8[%c0_16, %c0_17] : memref<8x128xf32, #tpu.memory_space<vmem>>, vector<8x128xf32>
      %c0_18 = arith.constant 0 : index
      %c0_19 = arith.constant 0 : index
      %20 = vector.load %arg6[%c0_18, %c0_19] : memref<1x128xf32, #tpu.memory_space<vmem>>, vector<1x128xf32>
      %21 = vector.broadcast %20 : vector<1x128xf32> to vector<8x128xf32>
      %22 = arith.addf %19, %21 : vector<8x128xf32>
      %c0_20 = arith.constant 0 : index
      %c0_21 = arith.constant 0 : index
      %23 = vector.load %arg7[%c0_20, %c0_21] : memref<8x128xf32, #tpu.memory_space<vmem>>, vector<8x128xf32>
      tpu.vector_store %arg7[%c0_20, %c0_21], %22 {strides = array<i32>} : memref<8x128xf32, #tpu.memory_space<vmem>>, vector<8x128xf32>,
    } else {
    }
    return
  }
  func.func @transform_0(%arg0: i32, %arg1: i32) -> (i32, i32) {
    %c0_i32 = arith.constant 0 : i32
    %c0_i32_0 = arith.constant 0 : i32
    return %arg0, %c0_i32 : i32, i32
  }
  func.func @transform_1(%arg0: i32, %arg1: i32) -> (i32, i32) {
    %c0_i32 = arith.constant 0 : i32
    %c0_i32_0 = arith.constant 0 : i32
    return %c0_i32, %arg1 : i32, i32
  }
  func.func @transform_2(%arg0: i32, %arg1: i32) -> (i32, i32) {
    %c0_i32 = arith.constant 0 : i32
    %c0_i32_0 = arith.constant 0 : i32
    return %c0_i32, %arg1 : i32, i32
  }
  func.func @transform_3(%arg0: i32, %arg1: i32) -> (i32, i32) {
    %c0_i32 = arith.constant 0 : i32
    %c0_i32_0 = arith.constant 0 : i32
    return %arg1, %c0_i32 : i32, i32
  }
  func.func @transform_4(%arg0: i32, %arg1: i32) -> (i32, i32) {
    %c0_i32 = arith.constant 0 : i32
    %c0_i32_0 = arith.constant 0 : i32
    %c0_i32_1 = arith.constant 0 : i32
    return %c0_i32, %c0_i32_0 : i32, i32
  }
  func.func @transform_5(%arg0: i32, %arg1: i32) -> (i32, i32) {
    %c0_i32 = arith.constant 0 : i32
    %c0_i32_0 = arith.constant 0 : i32
    return %arg0, %c0_i32 : i32, i32
  }
}

</mosaic_0001>

<llo_original>
// kernel: forward.1
$region0: #{forward.1}
  #allocation0 [shape = 'u32[]', space=smem, size = 0x4, offset = 0x4, fixed_abs, tag = 'smem constant byte address 0x4 - core index']
  #allocation1 [shape = 'u32[72,128]{1,0:T(1,128)}', space=vmem, size = 0x9000, scoped, tag = 'internal scratch']
  #allocation2 [shape = 'f32[8,128]{1,0:T(8,128)}', space=vmem, size = 0x1000, scoped, tag = 'scratch operand']
  %s0 = inlined_call_operand.vmem [shape: f32[8,128], index: 0, kind: input, shape index: {}]
  %s1 = inlined_call_operand.hbm [shape: f32[128,128], index: 1, kind: input, shape index: {}]
  %s2 = inlined_call_operand.vmem [shape: f32[1,128], index: 2, kind: input, shape index: {}]
  %s3 = inlined_call_operand.hbm [shape: f32[128,128], index: 3, kind: input, shape index: {}]
  %s4 = inlined_call_operand.vmem [shape: f32[1,128], index: 4, kind: input, shape index: {}]
  %s5 = inlined_call_operand.hbm [shape: f32[8,128], index: 5, kind: output, shape index: {}]
  %s6 = sld [smem:[#allocation0]]
  $region46: #{forward.1} parent=0
    _
  %s8 = ssub.s32 1, %s6
  %s9 = scalar_select 0, %s8, %s6
  $region1: #{forward.1} parent=0
    #allocation3 [shape = 'u8[65536]{0}', space=vmem, size = 0x10000, scoped, tag = 'input window, operand 1, single buffered']
    #allocation4 [shape = 's32[1]{0}', space=sflag, size = 0x4, scoped, tag = 'scoped memory for forward.1']
    #allocation5 [shape = 's32[1]{0}', space=sflag, size = 0x4, scoped, tag = 'scoped memory for forward.1']
    #allocation6 [shape = 'u8[65536]{0}', space=vmem, size = 0x10000, scoped, tag = 'input window, operand 3, single buffered']
    #allocation7 [shape = 's32[1]{0}', space=sflag, size = 0x4, scoped, tag = 'scoped memory for forward.1']
    #allocation8 [shape = 'u8[4096]{0}', space=vmem, size = 0x1000, scoped, tag = 'output window, operand 0, single buffered']
    %10 = vsyncpa [#allocation4], 0
    %11 = vsyncpa [#allocation7], 0
    %12 = vsyncpa [#allocation5], 0
    // Predicated region
    $region2: #{forward.1} parent=1 // pred_check
      _
    $region3: #{forward.1} parent=1 // pred_check_branch
      %14 = sbr.rel (0) target = $region5
    $region4: #{forward.1} parent=1 // pred_region
      _
    $region5: #{forward.1} parent=1 // pred_fallthru
      _
    // Predicated region
    $region6: #{forward.1} parent=1 // pred_check
      _
    $region7: #{forward.1} parent=1 // pred_check_branch
      %16 = sbr.rel (0) target = $region9
    $region8: #{forward.1} parent=1 // pred_region
      %18 = vsyncadd [#allocation4], 0
      %s19 = sshll.u32 %s1, 4
      %s20 = int_to_ptr.hbm [resolvable:$true] %s19
      %s21 = sshll.u32 [#allocation3], 4
      %s22 = int_to_ptr.vmem [resolvable:$true] %s21
      %27 = dma.hbm_to_vmem [thread:$0]  %s20, 2048, %s22, [#allocation4], 128, 128, 8
    $region9: #{forward.1} parent=1 // pred_fallthru
      _
    // Predicated region
    $region10: #{forward.1} parent=1 // pred_check
      _
    $region11: #{forward.1} parent=1 // pred_check_branch
      %29 = sbr.rel (0) target = $region13
    $region12: #{forward.1} parent=1 // pred_region
      _
    $region13: #{forward.1} parent=1 // pred_fallthru
      _
    // Predicated region
    $region14: #{forward.1} parent=1 // pred_check
      _
    $region15: #{forward.1} parent=1 // pred_check_branch
      %31 = sbr.rel (0) target = $region17
    $region16: #{forward.1} parent=1 // pred_region
      %33 = vsyncadd [#allocation7], 0
      %s34 = sshll.u32 %s3, 4
      %s35 = int_to_ptr.hbm [resolvable:$true] %s34
      %s36 = sshll.u32 [#allocation6], 4
      %s37 = int_to_ptr.vmem [resolvable:$true] %s36
      %42 = dma.hbm_to_vmem [thread:$0]  %s35, 2048, %s37, [#allocation7], 128, 128, 8
    $region17: #{forward.1} parent=1 // pred_fallthru
      _
    // Predicated region
    $region18: #{forward.1} parent=1 // pred_check
      _
    $region19: #{forward.1} parent=1 // pred_check_branch
      %44 = sbr.rel (0) target = $region21
    $region20: #{forward.1} parent=1 // pred_region
      _
    $region21: #{forward.1} parent=1 // pred_fallthru
      _
    // Predicated region
    $region22: #{forward.1} parent=1 // pred_check
      _
    $region23: #{forward.1} parent=1 // pred_check_branch
      %46 = sbr.rel (0) target = $region25
    $region24: #{forward.1} parent=1 // pred_region
      %48 = dma.done [#allocation4], 2048
    $region25: #{forward.1} parent=1 // pred_fallthru
      _
    // Predicated region
    $region26: #{forward.1} parent=1 // pred_check
      _
    $region27: #{forward.1} parent=1 // pred_check_branch
      %50 = sbr.rel (0) target = $region29
    $region28: #{forward.1} parent=1 // pred_region
      %52 = dma.done [#allocation7], 2048
    $region29: #{forward.1} parent=1 // pred_fallthru
      _
    %p53 = scmp.eq.s32.totalorder 0, 0
    // Predicated region
    $region30: #{forward.1} parent=1 // pred_check
      %p54 = pneg %p53
    $region31: #{forward.1} parent=1 // pred_check_branch
      %56 = sbr.rel (%p54) target = $region33
    $region32: #{forward.1} parent=1 // pred_region
      %57 = vst [vmem:[#allocation2] sm:$0xff] 0.0
    $region33: #{forward.1} parent=1 // pred_fallthru
      _
    %v58 = vld [vmem:[%s0] sm:$0xff]
    %v59 = vld [vmem:[#allocation3] sm:$0xff]
    %v60 = vld [vmem:[#allocation3 + $0x8] sm:$0xff]
    %v61 = vld [vmem:[#allocation3 + $0x10] sm:$0xff]
    %v62 = vld [vmem:[#allocation3 + $0x18] sm:$0xff]
    %v63 = vld [vmem:[#allocation3 + $0x20] sm:$0xff]
    %v64 = vld [vmem:[#allocation3 + $0x28] sm:$0xff]
    %v65 = vld [vmem:[#allocation3 + $0x30] sm:$0xff]
    %v66 = vld [vmem:[#allocation3 + $0x38] sm:$0xff]
    %v67 = vld [vmem:[#allocation3 + $0x40] sm:$0xff]
    %v68 = vld [vmem:[#allocation3 + $0x48] sm:$0xff]
    %v69 = vld [vmem:[#allocation3 + $0x50] sm:$0xff]
    %v70 = vld [vmem:[#allocation3 + $0x58] sm:$0xff]
    %v71 = vld [vmem:[#allocation3 + $0x60] sm:$0xff]
    %v72 = vld [vmem:[#allocation3 + $0x68] sm:$0xff]
    %v73 = vld [vmem:[#allocation3 + $0x70] sm:$0xff]
    %v74 = vld [vmem:[#allocation3 + $0x78] sm:$0xff]
    %v75 = vld [vmem:[%s2] sm:$0x1]
    %v77 = vperm.slane %v75, 0
    %79 = vmatpush.msra.mxu0 %v74
    %80 = vmatpush.msra.mxu0 %v73
    %81 = vmatpush.msra.mxu0 %v72
    %82 = vmatpush.msra.mxu0 %v71
    %83 = vmatpush.msra.mxu0 %v70
    %84 = vmatpush.msra.mxu0 %v69
    %85 = vmatpush.msra.mxu0 %v68
    %86 = vmatpush.msra.mxu0 %v67
    %87 = vmatpush.msra.mxu0 %v66
    %88 = vmatpush.msra.mxu0 %v65
    %89 = vmatpush.msra.mxu0 %v64
    %90 = vmatpush.msra.mxu0 %v63
    %91 = vmatpush.msra.mxu0 %v62
    %92 = vmatpush.msra.mxu0 %v61
    %93 = vmatpush.msra.mxu0 %v60
    %94 = vmatpush.msra.mxu0 %v59
    %95 = vmatmul.f32.gmra.mxu0 %v58
    %v96 = vpop.f32.mrf.mxu0
    %v97 = vadd.f32 %v77, %v96
    %98 = vdwg.mxu0
    %v99 = vmax.f32 %v97, 0.0
    %v100 = vld [vmem:[#allocation2] sm:$0xff]
    %v101 = vld [vmem:[#allocation6] sm:$0xff]
    %v102 = vld [vmem:[#allocation6 + $0x8] sm:$0xff]
    %v103 = vld [vmem:[#allocation6 + $0x10] sm:$0xff]
    %v104 = vld [vmem:[#allocation6 + $0x18] sm:$0xff]
    %v105 = vld [vmem:[#allocation6 + $0x20] sm:$0xff]
    %v106 = vld [vmem:[#allocation6 + $0x28] sm:$0xff]
    %v107 = vld [vmem:[#allocation6 + $0x30] sm:$0xff]
    %v108 = vld [vmem:[#allocation6 + $0x38] sm:$0xff]
    %v109 = vld [vmem:[#allocation6 + $0x40] sm:$0xff]
    %v110 = vld [vmem:[#allocation6 + $0x48] sm:$0xff]
    %v111 = vld [vmem:[#allocation6 + $0x50] sm:$0xff]
    %v112 = vld [vmem:[#allocation6 + $0x58] sm:$0xff]
    %v113 = vld [vmem:[#allocation6 + $0x60] sm:$0xff]
    %v114 = vld [vmem:[#allocation6 + $0x68] sm:$0xff]
    %v115 = vld [vmem:[#allocation6 + $0x70] sm:$0xff]
    %v116 = vld [vmem:[#allocation6 + $0x78] sm:$0xff]
    %117 = vmatpush.msra.mxu0 %v116
    %118 = vmatpush.msra.mxu0 %v115
    %119 = vmatpush.msra.mxu0 %v114
    %120 = vmatpush.msra.mxu0 %v113
    %121 = vmatpush.msra.mxu0 %v112
    %122 = vmatpush.msra.mxu0 %v111
    %123 = vmatpush.msra.mxu0 %v110
    %124 = vmatpush.msra.mxu0 %v109
    %125 = vmatpush.msra.mxu0 %v108
    %126 = vmatpush.msra.mxu0 %v107
    %127 = vmatpush.msra.mxu0 %v106
    %128 = vmatpush.msra.mxu0 %v105
    %129 = vmatpush.msra.mxu0 %v104
    %130 = vmatpush.msra.mxu0 %v103
    %131 = vmatpush.msra.mxu0 %v102
    %132 = vmatpush.msra.mxu0 %v101
    %133 = vmatmul.f32.gmra.mxu0 %v99
    %v134 = vpop.f32.mrf.mxu0
    %v135 = vadd.f32 0.0, %v134
    %136 = vdwg.mxu0
    %v137 = vadd.f32 %v100, %v135
    %138 = vst [vmem:[#allocation2] sm:$0xff] %v137
    // Predicated region
    $region34: #{forward.1} parent=1 // pred_check
      %p139 = pneg %p53
    $region35: #{forward.1} parent=1 // pred_check_branch
      %141 = sbr.rel (%p139) target = $region37
    $region36: #{forward.1} parent=1 // pred_region
      %v142 = vld [vmem:[#allocation2] sm:$0xff]
      %v143 = vld [vmem:[%s4] sm:$0x1]
      %v145 = vperm.slane %v143, 0
      %v147 = vadd.f32 %v142, %v145
      %148 = vst [vmem:[#allocation8] sm:$0xff] %v147
    $region37: #{forward.1} parent=1 // pred_fallthru
      _
    // Predicated region
    $region38: #{forward.1} parent=1 // pred_check
      _
    $region39: #{forward.1} parent=1 // pred_check_branch
      %150 = sbr.rel (0) target = $region41
    $region40: #{forward.1} parent=1 // pred_region
      %152 = vsyncadd [#allocation5], 0
      %s154 = sshll.u32 [#allocation8], 4
      %s155 = int_to_ptr.vmem [resolvable:$true] %s154
      %s156 = sshll.u32 %s5, 4
      %s157 = int_to_ptr.hbm [resolvable:$true] %s156
      %159 = dma.vmem_to_hbm [thread:$0]  %s155, 128, %s157, [#allocation5]
    $region41: #{forward.1} parent=1 // pred_fallthru
      _
    // Predicated region
    $region42: #{forward.1} parent=1 // pred_check
      _
    $region43: #{forward.1} parent=1 // pred_check_branch
      %161 = sbr.rel (0) target = $region45
    $region44: #{forward.1} parent=1 // pred_region
      %163 = dma.done [#allocation5], 128
    $region45: #{forward.1} parent=1 // pred_fallthru
      _
    %164 = vsyncpa [#allocation4], 1
    %165 = vsyncpa [#allocation7], 1
    %166 = vsyncpa [#allocation5], 1

</llo_original>
